<compile_context>
chip_gen: v7x
topology: tpu7x:2x2x1
jax: 0.10.0
libtpu: 0.0.40
codegen_flags: <defaults>
</compile_context>

<pallas_src>
import functools
import math

import jax
import jax.numpy as jnp
from jax.experimental import pallas as pl
from jax.experimental.pallas import tpu as pltpu

_LANE = 128


def _round_up(n: int, m: int) -> int:
    return ((n + m - 1) // m) * m


def _pick_tile_div(dim: int, max_tile: int) -> int:
    """Largest multiple-of-128 divisor of `dim` (dim itself a 128-multiple)
    that is <= max_tile; never smaller than 128."""
    t = min(max_tile, dim)
    t = max((t // _LANE) * _LANE, _LANE)
    while t > _LANE:
        if dim % t == 0:
            return t
        t -= _LANE
    return _LANE


def _vmem_budget():
    """(weight-tile byte budget, vmem_limit_bytes) -- generation aware."""
    try:
        vmem = pltpu.get_tpu_info().vmem_capacity_bytes
    except Exception:
        vmem = 64 * 1024 * 1024
    if vmem >= 96 * 1024 * 1024:
        # v5e / v6e: 128 MiB physical VMEM -> big tiles, generous limit.
        return 32 * 1024 * 1024, 96 * 1024 * 1024
    # v7x: 64 MiB physical VMEM -> 16 MiB tiles, 2x double-buffered ~= 32 MiB.
    return 16 * 1024 * 1024, 48 * 1024 * 1024


def _epilogue(y, gamma_ref, beta_ref, b_ref, batch_normalization, eps):
    if batch_normalization:
        # Training-mode batch statistics (biased variance), PyTorch semantics.
        mean = jnp.mean(y, axis=0, keepdims=True)
        diff = y - mean
        var = jnp.mean(diff * diff, axis=0, keepdims=True)
        # Fold rsqrt(var+eps)*gamma into one (1, TN) scale row: a single
        # broadcast multiply-add over the (B, TN) tile.
        scale = jax.lax.rsqrt(var + eps) * gamma_ref[...]
        y = diff * scale + beta_ref[...]
    else:
        y = y + b_ref[...]
    # Activation: ReLU.  Dropout: identity (eval mode).
    # TODO(synk): training-mode inverted dropout via pltpu.prng_random_bits.
    return jnp.maximum(y, 0.0)


def _single_pass_kernel(*refs, batch_normalization: bool, eps: float):
    """grid=(F_tiles,): x fully VMEM-resident, no reduction axis."""
    if batch_normalization:
        x_ref, w_ref, gamma_ref, beta_ref, o_ref = refs
        b_ref = None
    else:
        x_ref, w_ref, b_ref, o_ref = refs
        gamma_ref = beta_ref = None
    # Native bf16 x bf16 MXU feed, f32 accumulation -- no VPU upcast of the
    # weight tile.
    y = jnp.dot(x_ref[...], w_ref[...], preferred_element_type=jnp.float32)
    o_ref[...] = _epilogue(y, gamma_ref, beta_ref, b_ref,
                           batch_normalization, eps).astype(o_ref.dtype)


def _reduction_kernel(*refs, batch_normalization: bool, eps: float):
    """grid=(F_tiles, K_tiles): f32 output block doubles as the accumulator."""
    if batch_normalization:
        x_ref, w_ref, gamma_ref, beta_ref, o_ref = refs
        b_ref = None
    else:
        x_ref, w_ref, b_ref, o_ref = refs
        gamma_ref = beta_ref = None

    k = pl.program_id(1)

    @pl.when(k == 0)
    def _():
        o_ref[...] = jnp.zeros_like(o_ref)

    o_ref[...] += jnp.dot(x_ref[...], w_ref[...],
                          preferred_element_type=jnp.float32)

    @pl.when(k == pl.num_programs(1) - 1)
    def _():
        o_ref[...] = _epilogue(o_ref[...], gamma_ref, beta_ref, b_ref,
                               batch_normalization, eps).astype(o_ref.dtype)


def prepare_params(w, b, gamma, beta):
    """One-time parameter setup (not per call): pad IN/F to multiples of 128,
    transpose + cast the weight to a persistent (IN_pad, F_pad) bf16 layout.
    w: (F, IN) f32 (PyTorch layout); b/gamma/beta: (1, F) f32 or None."""
    F, IN = w.shape
    IN_pad = _round_up(IN, _LANE)
    F_pad = _round_up(F, _LANE)
    w_t = jnp.zeros((IN_pad, F_pad), jnp.bfloat16).at[:IN, :F].set(
        w.T.astype(jnp.bfloat16))

    def pad_vec(v):
        if v is None:
            return None
        return jnp.zeros((1, F_pad), jnp.float32).at[:, :F].set(
            v.reshape(1, F).astype(jnp.float32))

    return w_t, pad_vec(b), pad_vec(gamma), pad_vec(beta)


def unflatten_dense_block(x, w_t, b, gamma, beta, out_size, *,
                          batch_normalization=True, eps=1e-5,
                          max_tk=None, max_tn=None):
    """x: (B, in_size) f32; w_t: (IN_pad, F_pad) bf16 persistent layout;
    b/gamma/beta: (1, F_pad) f32.  Returns (B, *out_size) f32."""
    B, IN = x.shape
    IN_pad, F_pad = w_t.shape
    F = math.prod(out_size)
    assert IN <= IN_pad and F <= F_pad

    # bf16 cast of the small operand happens once here (not per grid step).
    xb = x.astype(jnp.bfloat16)
    if IN_pad != IN:
        xb = jnp.pad(xb, ((0, 0), (0, IN_pad - IN)))

    tile_budget, vmem_limit = _vmem_budget()

    # Small-x fast path: drop the reduction grid axis, keep x VMEM-resident.
    single_pass = (
        (max_tk is None or max_tk >= IN_pad)
        and B * IN_pad * 2 <= 4 * 1024 * 1024          # bf16 x tile stays resident
        and IN_pad * _LANE * 2 <= tile_budget          # 128-wide weight tile fits
    )
    TK = IN_pad if single_pass else _pick_tile_div(IN_pad, max_tk or 2048)

    # Weight tile (the dominant HBM stream) sized to the generation budget.
    tn_cap = max(tile_budget // (TK * 2), _LANE)
    if F_pad >= 2 * _LANE:
        tn_cap = min(tn_cap, F_pad // 2)               # >=2 F tiles for v7x megacore
    if max_tn is not None:
        tn_cap = min(tn_cap, max_tn)
    TN = _pick_tile_div(F_pad, tn_cap)

    vec_args = (gamma, beta) if batch_normalization else (b,)

    if single_pass:
        grid = (F_pad // TN,)
        x_spec = pl.BlockSpec((B, IN_pad), lambda j: (0, 0))   # DMA'd once, resident
        w_spec = pl.BlockSpec((IN_pad, TN), lambda j: (0, j))  # the big HBM stream
        vec_spec = pl.BlockSpec((1, TN), lambda j: (0, j))
        out_spec = pl.BlockSpec((B, TN), lambda j: (0, j))
        dims = ("parallel",)
        kernel = _single_pass_kernel
    else:
        grid = (F_pad // TN, IN_pad // TK)                      # K (reduction) last
        x_spec = pl.BlockSpec((B, TK), lambda j, k: (0, k))
        w_spec = pl.BlockSpec((TK, TN), lambda j, k: (k, j))
        vec_spec = pl.BlockSpec((1, TN), lambda j, k: (0, j))
        out_spec = pl.BlockSpec((B, TN), lambda j, k: (0, j))   # resident across k
        dims = ("parallel", "arbitrary")
        kernel = _reduction_kernel

    in_specs = [x_spec, w_spec] + [vec_spec] * len(vec_args)

    flat = pl.pallas_call(
        functools.partial(kernel, batch_normalization=batch_normalization, eps=eps),
        out_shape=jax.ShapeDtypeStruct((B, F_pad), jnp.float32),
        grid=grid,
        in_specs=in_specs,
        out_specs=out_spec,
        compiler_params=pltpu.CompilerParams(
            dimension_semantics=dims,
            vmem_limit_bytes=vmem_limit,
        ),
    )(xb, w_t, *vec_args)

    if F_pad != F:
        flat = flat[:, :F]
    # Unflatten(dim=1, out_size): pure reshape glue outside the kernel.
    return flat.reshape((B,) + tuple(out_size))


def _reference(x, w, b, gamma, beta, out_size, batch_normalization=True, eps=1e-5):
    """Faithful to the PyTorch forward (training-mode BN, eval dropout); uses
    the same bf16 operand quantization the kernel feeds the MXU so tolerances
    stay tight.  The Linear bias is always added here -- BN must cancel it."""
    y = jnp.dot(x.astype(jnp.bfloat16), w.T.astype(jnp.bfloat16),
                preferred_element_type=jnp.float32) + b
    if batch_normalization:
        mean = jnp.mean(y, axis=0, keepdims=True)
        var = jnp.mean((y - mean) ** 2, axis=0, keepdims=True)
        y = (y - mean) * jax.lax.rsqrt(var + eps) * gamma + beta
    y = jnp.maximum(y, 0.0)
    return y.reshape((x.shape[0],) + tuple(out_size))


def _init_params(key, in_size, out_size):
    F = math.prod(out_size)
    kw, kb = jax.random.split(key)
    bound = 1.0 / math.sqrt(in_size)       # nn.Linear default init
    w = jax.random.uniform(kw, (F, in_size), minval=-bound, maxval=bound,
                           dtype=jnp.float32)
    b = jax.random.uniform(kb, (1, F), minval=-bound, maxval=bound,
                           dtype=jnp.float32)
    gamma = jnp.ones((1, F), jnp.float32)  # BatchNorm1d default init
    beta = jnp.zeros((1, F), jnp.float32)
    return w, b, gamma, beta


if __name__ == "__main__":
    key = jax.random.PRNGKey(0)

    # Case 1: lane-aligned shapes -- batch=8, in=256, out=(8,16,16) -> F=2048.
    B, IN, OUT = 8, 256, (8, 16, 16)
    k1, k2, key = jax.random.split(key, 3)
    x = jax.random.normal(k1, (B, IN), jnp.float32)
    w, b, gamma, beta = _init_params(k2, IN, OUT)
    w_t, b_p, g_p, be_p = prepare_params(w, b, gamma, beta)

    for bn in (True, False):
        ref = _reference(x, w, b, gamma, beta, OUT, batch_normalization=bn)
        # Default path (small x -> single-pass, no reduction grid axis).
        out = jax.block_until_ready(unflatten_dense_block(
            x, w_t, b_p, g_p, be_p, OUT, batch_normalization=bn))
        assert out.shape == (B,) + OUT, out.shape
        assert jnp.allclose(out, ref, atol=5e-4, rtol=5e-4), f"single-pass bn={bn}"
        # Force small tiles to exercise the general K-reduction path too.
        out_r = jax.block_until_ready(unflatten_dense_block(
            x, w_t, b_p, g_p, be_p, OUT, batch_normalization=bn,
            max_tk=128, max_tn=512))
        assert jnp.allclose(out_r, ref, atol=5e-4, rtol=5e-4), f"reduction bn={bn}"

    # Case 2: non-128-multiple sizes exercise the padding path.
    B2, IN2, OUT2 = 4, 200, (4, 10, 10)   # F = 400 -> padded to 512
    k3, k4, key = jax.random.split(key, 3)
    x2 = jax.random.normal(k3, (B2, IN2), jnp.float32)
    w2, b2, g2, be2 = _init_params(k4, IN2, OUT2)
    w2_t, b2_p, g2_p, be2_p = prepare_params(w2, b2, g2, be2)

    for bn in (True, False):
        ref2 = _reference(x2, w2, b2, g2, be2, OUT2, batch_normalization=bn)
        out2 = jax.block_until_ready(unflatten_dense_block(
            x2, w2_t, b2_p, g2_p, be2_p, OUT2, batch_normalization=bn))
        assert out2.shape == (B2,) + OUT2, out2.shape
        assert jnp.allclose(out2, ref2, atol=5e-4, rtol=5e-4), f"padded bn={bn}"

    print("KERNEL_OK")
</pallas_src>

<mosaic_0001>
module attributes {stable_mosaic.version = 11 : i64} {
  func.func @_single_pass_kernel(%arg0: i32, %arg1: memref<8x256xbf16, #tpu.memory_space<vmem>>, %arg2: memref<256x1024xbf16, #tpu.memory_space<vmem>>, %arg3: memref<1x1024xf32, #tpu.memory_space<vmem>>, %arg4: memref<1x1024xf32, #tpu.memory_space<vmem>>, %arg5: memref<8x1024xf32, #tpu.memory_space<vmem>>) attributes {dimension_semantics = [#tpu.dimension_semantics<parallel>], iteration_bounds = array<i64: 2>, scalar_prefetch = 0 : i64, scratch_operands = 0 : i64, tpu.core_type = #tpu.core_type<tc>, window_params = [{pipeline_mode = #tpu.pipeline_mode<synchronous>, transform_indices = @transform_0, window_bounds = array<i64: 8, 256>}, {transform_indices = @transform_1, window_bounds = array<i64: 256, 1024>}, {transform_indices = @transform_2, window_bounds = array<i64: 1, 1024>}, {transform_indices = @transform_3, window_bounds = array<i64: 1, 1024>}, {transform_indices = @transform_4, window_bounds = array<i64: 8, 1024>}]} {
    %c0 = arith.constant 0 : index
    %c0_0 = arith.constant 0 : index
    %0 = vector.load %arg1[%c0, %c0_0] : memref<8x256xbf16, #tpu.memory_space<vmem>>, vector<8x256xbf16>
    %c0_1 = arith.constant 0 : index
    %c0_2 = arith.constant 0 : index
    %1 = vector.load %arg2[%c0_1, %c0_2] : memref<256x1024xbf16, #tpu.memory_space<vmem>>, vector<256x1024xbf16>
    %cst = arith.constant dense<0.000000e+00> : vector<8x1024xf32>
    %2 = tpu.matmul %0, %1, %cst {dimension_numbers = #tpu.dot_dimension_numbers<[1], [0], [0], [1], [0, 0, 1, 1], [], []>} : vector<8x256xbf16>, vector<256x1024xbf16>, vector<8x1024xf32> -> vector<8x1024xf32>
    %cst_3 = arith.constant dense<0.000000e+00> : vector<1024xf32>
    %3 = vector.multi_reduction <add>, %2, %cst_3 [0] : vector<8x1024xf32> to vector<1024xf32>
    %4 = vector.shape_cast %3 : vector<1024xf32> to vector<1x1024xf32>
    %cst_4 = arith.constant 8.000000e+00 : f32
    %5 = vector.broadcast %cst_4 : f32 to vector<1x1024xf32>
    %6 = arith.divf %4, %5 : vector<1x1024xf32>
    %7 = vector.broadcast %6 : vector<1x1024xf32> to vector<8x1024xf32>
    %8 = arith.subf %2, %7 : vector<8x1024xf32>
    %9 = arith.mulf %8, %8 : vector<8x1024xf32>
    %cst_5 = arith.constant dense<0.000000e+00> : vector<1024xf32>
    %10 = vector.multi_reduction <add>, %9, %cst_5 [0] : vector<8x1024xf32> to vector<1024xf32>
    %11 = vector.shape_cast %10 : vector<1024xf32> to vector<1x1024xf32>
    %cst_6 = arith.constant 8.000000e+00 : f32
    %12 = vector.broadcast %cst_6 : f32 to vector<1x1024xf32>
    %13 = arith.divf %11, %12 : vector<1x1024xf32>
    %cst_7 = arith.constant 9.99999974E-6 : f32
    %14 = vector.broadcast %cst_7 : f32 to vector<1x1024xf32>
    %15 = arith.addf %13, %14 : vector<1x1024xf32>
    %16 = math.rsqrt %15 : vector<1x1024xf32>
    %c0_8 = arith.constant 0 : index
    %c0_9 = arith.constant 0 : index
    %17 = vector.load %arg3[%c0_8, %c0_9] : memref<1x1024xf32, #tpu.memory_space<vmem>>, vector<1x1024xf32>
    %18 = arith.mulf %16, %17 : vector<1x1024xf32>
    %19 = vector.broadcast %18 : vector<1x1024xf32> to vector<8x1024xf32>
    %20 = arith.mulf %8, %19 : vector<8x1024xf32>
    %c0_10 = arith.constant 0 : index
    %c0_11 = arith.constant 0 : index
    %21 = vector.load %arg4[%c0_10, %c0_11] : memref<1x1024xf32, #tpu.memory_space<vmem>>, vector<1x1024xf32>
    %22 = vector.broadcast %21 : vector<1x1024xf32> to vector<8x1024xf32>
    %23 = arith.addf %20, %22 : vector<8x1024xf32>
    %cst_12 = arith.constant 0.000000e+00 : f32
    %24 = vector.broadcast %cst_12 : f32 to vector<8x1024xf32>
    %25 = arith.maximumf %23, %24 : vector<8x1024xf32>
    %c0_13 = arith.constant 0 : index
    %c0_14 = arith.constant 0 : index
    %26 = vector.load %arg5[%c0_13, %c0_14] : memref<8x1024xf32, #tpu.memory_space<vmem>>, vector<8x1024xf32>
    tpu.vector_store %arg5[%c0_13, %c0_14], %25 {strides = array<i32>} : memref<8x1024xf32, #tpu.memory_space<vmem>>, vector<8x1024xf32>,
    return
  }
  func.func @transform_0(%arg0: i32) -> (i32, i32) {
    %c0_i32 = arith.constant 0 : i32
    %c0_i32_0 = arith.constant 0 : i32
    %c0_i32_1 = arith.constant 0 : i32
    return %c0_i32, %c0_i32_0 : i32, i32
  }
  func.func @transform_1(%arg0: i32) -> (i32, i32) {
    %c0_i32 = arith.constant 0 : i32
    %c0_i32_0 = arith.constant 0 : i32
    return %c0_i32, %arg0 : i32, i32
  }
  func.func @transform_2(%arg0: i32) -> (i32, i32) {
    %c0_i32 = arith.constant 0 : i32
    %c0_i32_0 = arith.constant 0 : i32
    return %c0_i32, %arg0 : i32, i32
  }
  func.func @transform_3(%arg0: i32) -> (i32, i32) {
    %c0_i32 = arith.constant 0 : i32
    %c0_i32_0 = arith.constant 0 : i32
    return %c0_i32, %arg0 : i32, i32
  }
  func.func @transform_4(%arg0: i32) -> (i32, i32) {
    %c0_i32 = arith.constant 0 : i32
    %c0_i32_0 = arith.constant 0 : i32
    return %c0_i32, %arg0 : i32, i32
  }
}

</mosaic_0001>

<llo_original>
// kernel: tpu_custom_call.1
$region0: #{tpu_custom_call.1}
  #allocation0 [shape = 'u32[]', space=smem, size = 0x4, offset = 0x4, fixed_abs, tag = 'smem constant byte address 0x4 - core index']
  #allocation1 [shape = 'u32[144,128]{1,0:T(1,128)}', space=vmem, size = 0x12000, scoped, tag = 'internal scratch']
  %s0 = inlined_call_operand.hbm [shape: bf16[8,256], index: 0, kind: input, shape index: {}]
  %s1 = inlined_call_operand.hbm [shape: bf16[256,2048], index: 1, kind: input, shape index: {}]
  %s2 = inlined_call_operand.hbm [shape: f32[1,2048], index: 2, kind: input, shape index: {}]
  %s3 = inlined_call_operand.hbm [shape: f32[1,2048], index: 3, kind: input, shape index: {}]
  %s4 = inlined_call_operand.hbm [shape: f32[8,2048], index: 4, kind: output, shape index: {}]
  %s5 = sld [smem:[#allocation0]]
  $region65: #{tpu_custom_call.1} parent=0
    _
  %s7 = ssub.s32 1, %s5
  %s8 = scalar_select 0, %s7, %s5
  $region1: #{tpu_custom_call.1} parent=0
    #allocation2 [shape = 'u8[4096]{0}', space=vmem, size = 0x1000, scoped, tag = 'input window, operand 0, single buffered']
    #allocation3 [shape = 's32[2]{0}', space=sflag, size = 0x8, scoped, tag = 'scoped memory for tpu_custom_call.1']
    #allocation4 [shape = 's32[2]{0}', space=sflag, size = 0x8, scoped, tag = 'scoped memory for tpu_custom_call.1']
    #allocation5 [shape = 'u8[1048576]{0}', space=vmem, size = 0x100000, scoped, tag = 'input window, operand 1']
    #allocation6 [shape = 's32[2]{0}', space=sflag, size = 0x8, scoped, tag = 'scoped memory for tpu_custom_call.1']
    #allocation7 [shape = 'u8[8192]{0}', space=vmem, size = 0x2000, scoped, tag = 'input window, operand 2']
    #allocation8 [shape = 'u8[8192]{0}', space=vmem, size = 0x2000, scoped, tag = 'input window, operand 3']
    #allocation9 [shape = 's32[2]{0}', space=sflag, size = 0x8, scoped, tag = 'scoped memory for tpu_custom_call.1']
    #allocation10 [shape = 'u8[65536]{0}', space=vmem, size = 0x10000, scoped, tag = 'output window, operand 0']
    %9 = vsyncpa [#allocation3], 0
    %10 = vsyncpa [#allocation6], 0
    %s11 = scalar_lea.sflag [#allocation6], 1
    %12 = vsyncpa %s11, 0
    %13 = vsyncpa [#allocation9], 0
    %s14 = scalar_lea.sflag [#allocation9], 1
    %15 = vsyncpa %s14, 0
    %16 = vsyncpa [#allocation4], 0
    %s17 = scalar_lea.sflag [#allocation4], 1
    %18 = vsyncpa %s17, 0
    loop: start=0, step=1, limit=4
    $region2: #{tpu_custom_call.1} parent=1 // loop_pre_header
      _
    $region3: #{tpu_custom_call.1} parent=1 // loop_header
      %s20 = sphi 0, %s24
      %p21 = scmp.ge.s32.totalorder %s20, 4
      %s28 = sphi 0, %s28
      %s30 = sphi 0, %s28
      %s31 = sphi 0, %s30
      %s45 = sphi 0, %s31
      %s51 = sphi 0, %s53
      %s54 = sphi 0, %s51
      %s55 = sphi 0, %s54
      %s71 = sphi 0, %s55
      %s77 = sphi 0, %s79
      %s80 = sphi 0, %s77
      %s81 = sphi 0, %s80
      %s97 = sphi 0, %s81
      %s103 = sphi 0, %s105
      %s106 = sphi 0, %s103
      %s107 = sphi 0, %s106
      %s123 = sphi 0, %s107
      %s129 = sphi 0, %s131
      %s132 = sphi 0, %s129
      %s133 = sphi 0, %s132
      %s149 = sphi 0, %s133
    $region4: #{tpu_custom_call.1} parent=1 // loop_header_branch
      %23 = sbr.rel (%p21) target = $region8
    $region5: #{tpu_custom_call.1} parent=1 // loop_body
      %s25 = ssub.s32 %s20, 1
      %s26 = ssub.s32 %s20, 2
      %s27 = sadd.s32 %s20, 1
      %s29 = sadd.s32 %s28, 1
      %p32 = scmp.eq.s32.totalorder %s20, 1
      %p33 = scmp.ne.s32.totalorder %s28, %s30
      %p34 = scmp.eq.s32.totalorder %s20, 0
      %p35 = por %p33, %p34
      %p36 = scmp.ne.s32.totalorder %s28, %s30
      %p37 = scmp.eq.s32.totalorder %s25, 1
      %p38 = por %p36, %p37
      %p39 = scmp.ne.s32.totalorder %s30, %s31
      %p40 = scmp.eq.s32.totalorder %s25, 0
      %p41 = por %p39, %p40
      %p42 = scmp.ne.s32.totalorder %s30, %s31
      %p43 = scmp.eq.s32.totalorder %s26, 1
      %p44 = por %p42, %p43
      %p46 = scmp.ne.s32.totalorder %s31, %s45
      %p47 = scmp.eq.s32.totalorder %s26, 0
      %p48 = por %p46, %p47
      %s49 = ssub.s32 %s20, %s27
      %p50 = scmp.eq.s32.totalorder %s49, 0
      %s52 = sadd.s32 %s51, 1
      %s53 = scalar_select %p50, %s51, %s52
      %p56 = pneg %p50
      %p57 = scmp.eq.s32.totalorder %s20, 1
      %p58 = por %p56, %p57
      %p59 = scmp.ne.s32.totalorder %s51, %s54
      %p60 = scmp.eq.s32.totalorder %s20, 0
      %p61 = por %p59, %p60
      %p62 = scmp.ne.s32.totalorder %s51, %s54
      %p63 = scmp.eq.s32.totalorder %s25, 1
      %p64 = por %p62, %p63
      %p65 = scmp.ne.s32.totalorder %s54, %s55
      %p66 = scmp.eq.s32.totalorder %s25, 0
      %p67 = por %p65, %p66
      %p68 = scmp.ne.s32.totalorder %s54, %s55
      %p69 = scmp.eq.s32.totalorder %s26, 1
      %p70 = por %p68, %p69
      %p72 = scmp.ne.s32.totalorder %s55, %s71
      %p73 = scmp.eq.s32.totalorder %s26, 0
      %p74 = por %p72, %p73
      %s75 = ssub.s32 %s20, %s27
      %p76 = scmp.eq.s32.totalorder %s75, 0
      %s78 = sadd.s32 %s77, 1
      %s79 = scalar_select %p76, %s77, %s78
      %p82 = pneg %p76
      %p83 = scmp.eq.s32.totalorder %s20, 1
      %p84 = por %p82, %p83
      %p85 = scmp.ne.s32.totalorder %s77, %s80
      %p86 = scmp.eq.s32.totalorder %s20, 0
      %p87 = por %p85, %p86
      %p88 = scmp.ne.s32.totalorder %s77, %s80
      %p89 = scmp.eq.s32.totalorder %s25, 1
      %p90 = por %p88, %p89
      %p91 = scmp.ne.s32.totalorder %s80, %s81
      %p92 = scmp.eq.s32.totalorder %s25, 0
      %p93 = por %p91, %p92
      %p94 = scmp.ne.s32.totalorder %s80, %s81
      %p95 = scmp.eq.s32.totalorder %s26, 1
      %p96 = por %p94, %p95
      %p98 = scmp.ne.s32.totalorder %s81, %s97
      %p99 = scmp.eq.s32.totalorder %s26, 0
      %p100 = por %p98, %p99
      %s101 = ssub.s32 %s20, %s27
      %p102 = scmp.eq.s32.totalorder %s101, 0
      %s104 = sadd.s32 %s103, 1
      %s105 = scalar_select %p102, %s103, %s104
      %p108 = pneg %p102
      %p109 = scmp.eq.s32.totalorder %s20, 1
      %p110 = por %p108, %p109
      %p111 = scmp.ne.s32.totalorder %s103, %s106
      %p112 = scmp.eq.s32.totalorder %s20, 0
      %p113 = por %p111, %p112
      %p114 = scmp.ne.s32.totalorder %s103, %s106
      %p115 = scmp.eq.s32.totalorder %s25, 1
      %p116 = por %p114, %p115
      %p117 = scmp.ne.s32.totalorder %s106, %s107
      %p118 = scmp.eq.s32.totalorder %s25, 0
      %p119 = por %p117, %p118
      %p120 = scmp.ne.s32.totalorder %s106, %s107
      %p121 = scmp.eq.s32.totalorder %s26, 1
      %p122 = por %p120, %p121
      %p124 = scmp.ne.s32.totalorder %s107, %s123
      %p125 = scmp.eq.s32.totalorder %s26, 0
      %p126 = por %p124, %p125
      %s127 = ssub.s32 %s20, %s27
      %p128 = scmp.eq.s32.totalorder %s127, 0
      %s130 = sadd.s32 %s129, 1
      %s131 = scalar_select %p128, %s129, %s130
      %p134 = pneg %p128
      %p135 = scmp.eq.s32.totalorder %s20, 1
      %p136 = por %p134, %p135
      %p137 = scmp.ne.s32.totalorder %s129, %s132
      %p138 = scmp.eq.s32.totalorder %s20, 0
      %p139 = por %p137, %p138
      %p140 = scmp.ne.s32.totalorder %s129, %s132
      %p141 = scmp.eq.s32.totalorder %s25, 1
      %p142 = por %p140, %p141
      %p143 = scmp.ne.s32.totalorder %s132, %s133
      %p144 = scmp.eq.s32.totalorder %s25, 0
      %p145 = por %p143, %p144
      %p146 = scmp.ne.s32.totalorder %s132, %s133
      %p147 = scmp.eq.s32.totalorder %s26, 1
      %p148 = por %p146, %p147
      %p150 = scmp.ne.s32.totalorder %s133, %s149
      %p151 = scmp.eq.s32.totalorder %s26, 0
      %p152 = por %p150, %p151
      %p153 = scmp.le.s32.totalorder 1, %s20
      %p154 = scmp.lt.s32.totalorder %s20, 3
      %p155 = pnand %p153, %p154
      %p156 = pneg %p155
      // Predicated region
      $region9: #{tpu_custom_call.1} parent=5 // pred_check
        _
      $region10: #{tpu_custom_call.1} parent=5 // pred_check_branch
        %158 = sbr.rel (%p155) target = $region12
      $region11: #{tpu_custom_call.1} parent=5 // pred_region
        %s159 = ssub.s32 %s20, 1
        // Predicated region
        $region13: #{tpu_custom_call.1} parent=11 // pred_check
          %p160 = pneg %p41
        $region14: #{tpu_custom_call.1} parent=11 // pred_check_branch
          %162 = sbr.rel (%p160) target = $region16
        $region15: #{tpu_custom_call.1} parent=11 // pred_region
          %s164 = ssub.s32 128, 128
          %165 = vsyncadd [#allocation3], %s164
          %s167 = sshll.u32 [#allocation2], 4
          %s168 = int_to_ptr.vmem [resolvable:$true] %s167
          %170 = dma.hbm_to_vmem [thread:$0]  %s0, 128, %s168, [#allocation3]
        $region16: #{tpu_custom_call.1} parent=11 // pred_fallthru
          _
      $region12: #{tpu_custom_call.1} parent=5 // pred_fallthru
        _
      %p171 = scmp.lt.s32.totalorder %s20, 2
      // Predicated region
      $region17: #{tpu_custom_call.1} parent=5 // pred_check
        %p172 = pneg %p171
      $region18: #{tpu_custom_call.1} parent=5 // pred_check_branch
        %174 = sbr.rel (%p172) target = $region20
      $region19: #{tpu_custom_call.1} parent=5 // pred_region
        // Predicated region
        $region21: #{tpu_custom_call.1} parent=19 // pred_check
          %p175 = pneg %p61
        $region22: #{tpu_custom_call.1} parent=19 // pred_check_branch
          %177 = sbr.rel (%p175) target = $region24
        $region23: #{tpu_custom_call.1} parent=19 // pred_region
          %s178 = sand.u32 %s20, 1
          %s179 = scalar_lea.sflag [#allocation6], %s178
          %s180 = sand.u32 %s51, 1
          %s181 = smul.addr %s180, 1024
          %s182 = scalar_lea.vmem [#allocation5], %s181
          %s183 = smul.u32 8, %s20
          %s185 = ssub.s32 16384, 16384
          %186 = vsyncadd %s179, %s185
          %s187 = smul.addr %s183, 64
          %s188 = scalar_lea.hbm %s1, %s187
          %s189 = sshll.u32 %s182, 4
          %s190 = int_to_ptr.vmem [resolvable:$true] %s189
          %195 = dma.hbm_to_vmem [thread:$0]  %s188, 16384, %s190, %s179, 1024, 512, 32
        $region24: #{tpu_custom_call.1} parent=19 // pred_fallthru
          _
        // Predicated region
        $region25: #{tpu_custom_call.1} parent=19 // pred_check
          %p196 = pneg %p87
        $region26: #{tpu_custom_call.1} parent=19 // pred_check_branch
          %198 = sbr.rel (%p196) target = $region28
        $region27: #{tpu_custom_call.1} parent=19 // pred_region
          %s199 = sand.u32 %s20, 1
          %s200 = scalar_lea.sflag [#allocation6], %s199
          %s201 = sand.u32 %s77, 1
          %s202 = smul.addr %s201, 8
          %s203 = scalar_lea.vmem [#allocation7], %s202
          %s204 = smul.u32 8, %s20
          %s206 = ssub.s32 128, 128
          %207 = vsyncadd %s200, %s206
          %s208 = smul.addr %s204, 16
          %s209 = scalar_lea.hbm %s2, %s208
          %s211 = sshll.u32 %s203, 4
          %s212 = int_to_ptr.vmem [resolvable:$true] %s211
          %214 = dma.hbm_to_vmem [thread:$0]  %s209, 128, %s212, %s200
        $region28: #{tpu_custom_call.1} parent=19 // pred_fallthru
          _
        // Predicated region
        $region29: #{tpu_custom_call.1} parent=19 // pred_check
          %p215 = pneg %p113
        $region30: #{tpu_custom_call.1} parent=19 // pred_check_branch
          %217 = sbr.rel (%p215) target = $region32
        $region31: #{tpu_custom_call.1} parent=19 // pred_region
          %s218 = sand.u32 %s103, 1
          %s219 = scalar_lea.sflag [#allocation9], %s218
          %s220 = sand.u32 %s103, 1
          %s221 = smul.addr %s220, 8
          %s222 = scalar_lea.vmem [#allocation8], %s221
          %s223 = smul.u32 8, %s20
          %s225 = ssub.s32 128, 128
          %226 = vsyncadd %s219, %s225
          %s227 = smul.addr %s223, 16
          %s228 = scalar_lea.hbm %s3, %s227
          %s230 = sshll.u32 %s222, 4
          %s231 = int_to_ptr.vmem [resolvable:$true] %s230
          %233 = dma.hbm_to_vmem [thread:$0]  %s228, 128, %s231, %s219
        $region32: #{tpu_custom_call.1} parent=19 // pred_fallthru
          _
      $region20: #{tpu_custom_call.1} parent=5 // pred_fallthru
        _
      %p234 = scmp.le.s32.totalorder 1, %s20
      %p235 = scmp.lt.s32.totalorder %s20, 3
      %p236 = pnand %p234, %p235
      %p237 = pneg %p236
      // Predicated region
      $region33: #{tpu_custom_call.1} parent=5 // pred_check
        _
      $region34: #{tpu_custom_call.1} parent=5 // pred_check_branch
        %239 = sbr.rel (%p236) target = $region36
      $region35: #{tpu_custom_call.1} parent=5 // pred_region
        %s240 = ssub.s32 %s20, 1
        // Predicated region
        $region37: #{tpu_custom_call.1} parent=35 // pred_check
          %p241 = pneg %p41
        $region38: #{tpu_custom_call.1} parent=35 // pred_check_branch
          %243 = sbr.rel (%p241) target = $region40
        $region39: #{tpu_custom_call.1} parent=35 // pred_region
          %244 = dma.done [#allocation3], 128
        $region40: #{tpu_custom_call.1} parent=35 // pred_fallthru
          _
        %s245 = sand.u32 %s25, 1
        %s246 = scalar_lea.sflag [#allocation6], %s245
        %s247 = sand.u32 %s54, 1
        %s248 = smul.addr %s247, 1024
        %s249 = scalar_lea.vmem [#allocation5], %s248
        // Predicated region
        $region41: #{tpu_custom_call.1} parent=35 // pred_check
          %p250 = pneg %p67
        $region42: #{tpu_custom_call.1} parent=35 // pred_check_branch
          %252 = sbr.rel (%p250) target = $region44
        $region43: #{tpu_custom_call.1} parent=35 // pred_region
          %253 = dma.done %s246, 16384
        $region44: #{tpu_custom_call.1} parent=35 // pred_fallthru
          _
        %s254 = sand.u32 %s25, 1
        %s255 = scalar_lea.sflag [#allocation6], %s254
        %s256 = sand.u32 %s80, 1
        %s257 = smul.addr %s256, 8
        %s258 = scalar_lea.vmem [#allocation7], %s257
        // Predicated region
        $region45: #{tpu_custom_call.1} parent=35 // pred_check
          %p259 = pneg %p93
        $region46: #{tpu_custom_call.1} parent=35 // pred_check_branch
          %261 = sbr.rel (%p259) target = $region48
        $region47: #{tpu_custom_call.1} parent=35 // pred_region
          %262 = dma.done %s255, 128
        $region48: #{tpu_custom_call.1} parent=35 // pred_fallthru
          _
        %s263 = sand.u32 %s106, 1
        %s264 = scalar_lea.sflag [#allocation9], %s263
        %s265 = sand.u32 %s106, 1
        %s266 = smul.addr %s265, 8
        %s267 = scalar_lea.vmem [#allocation8], %s266
        // Predicated region
        $region49: #{tpu_custom_call.1} parent=35 // pred_check
          %p268 = pneg %p119
        $region50: #{tpu_custom_call.1} parent=35 // pred_check_branch
          %270 = sbr.rel (%p268) target = $region52
        $region51: #{tpu_custom_call.1} parent=35 // pred_region
          %271 = dma.done %s264, 128
        $region52: #{tpu_custom_call.1} parent=35 // pred_fallthru
          _
        %p272 = pneg %p41
        %p273 = pneg %p38
        %s274 = sand.u32 %s25, 1
        %s275 = scalar_lea.sflag [#allocation6], %s274
        %s276 = sand.u32 %s54, 1
        %s277 = smul.addr %s276, 1024
        %s278 = scalar_lea.vmem [#allocation5], %s277
        %p279 = pneg %p67
        %p280 = pneg %p64
        %s281 = sand.u32 %s25, 1
        %s282 = scalar_lea.sflag [#allocation6], %s281
        %s283 = sand.u32 %s80, 1
        %s284 = smul.addr %s283, 8
        %s285 = scalar_lea.vmem [#allocation7], %s284
        %p286 = pneg %p93
        %p287 = pneg %p90
        %s288 = sand.u32 %s106, 1
        %s289 = scalar_lea.sflag [#allocation9], %s288
        %s290 = sand.u32 %s106, 1
        %s291 = smul.addr %s290, 8
        %s292 = scalar_lea.vmem [#allocation8], %s291
        %p293 = pneg %p119
        %p294 = pneg %p116
        %p295 = pneg %p145
        %p296 = pneg %p142
        %s297 = sand.u32 %s132, 1
        %s298 = scalar_lea.sflag [#allocation4], %s297
        %s299 = sand.u32 %s132, 1
        %s300 = smul.addr %s299, 64
        %s301 = scalar_lea.vmem [#allocation10], %s300
        %s302 = smul.u32 8, %s25
        %s303 = smul.u32 8, %s25
        %s304 = smul.u32 8, %s25
        %s305 = smul.u32 8, %s25
        %v306 = vld [vmem:[#allocation2] sm:$0xff]
        %v307 = vld [vmem:[%s249] sm:$0xff]
        %v308 = vld [vmem:[%s249 + $0x8] sm:$0xff]
        %v309 = vld [vmem:[%s249 + $0x10] sm:$0xff]
        %v310 = vld [vmem:[%s249 + $0x18] sm:$0xff]
        %v311 = vld [vmem:[%s249 + $0x20] sm:$0xff]
        %v312 = vld [vmem:[%s249 + $0x28] sm:$0xff]
        %v313 = vld [vmem:[%s249 + $0x30] sm:$0xff]
        %v314 = vld [vmem:[%s249 + $0x38] sm:$0xff]
        %v315 = vld [vmem:[%s249 + $0x40] sm:$0xff]
        %v316 = vld [vmem:[%s249 + $0x48] sm:$0xff]
        %v317 = vld [vmem:[%s249 + $0x50] sm:$0xff]
        %v318 = vld [vmem:[%s249 + $0x58] sm:$0xff]
        %v319 = vld [vmem:[%s249 + $0x60] sm:$0xff]
        %v320 = vld [vmem:[%s249 + $0x68] sm:$0xff]
        %v321 = vld [vmem:[%s249 + $0x70] sm:$0xff]
        %v322 = vld [vmem:[%s249 + $0x78] sm:$0xff]
        %v323 = vld [vmem:[%s249 + $0x80] sm:$0xff]
        %v324 = vld [vmem:[%s249 + $0x88] sm:$0xff]
        %v325 = vld [vmem:[%s249 + $0x90] sm:$0xff]
        %v326 = vld [vmem:[%s249 + $0x98] sm:$0xff]
        %v327 = vld [vmem:[%s249 + $0xa0] sm:$0xff]
        %v328 = vld [vmem:[%s249 + $0xa8] sm:$0xff]
        %v329 = vld [vmem:[%s249 + $0xb0] sm:$0xff]
        %v330 = vld [vmem:[%s249 + $0xb8] sm:$0xff]
        %v331 = vld [vmem:[%s249 + $0xc0] sm:$0xff]
        %v332 = vld [vmem:[%s249 + $0xc8] sm:$0xff]
        %v333 = vld [vmem:[%s249 + $0xd0] sm:$0xff]
        %v334 = vld [vmem:[%s249 + $0xd8] sm:$0xff]
        %v335 = vld [vmem:[%s249 + $0xe0] sm:$0xff]
        %v336 = vld [vmem:[%s249 + $0xe8] sm:$0xff]
        %v337 = vld [vmem:[%s249 + $0xf0] sm:$0xff]
        %v338 = vld [vmem:[%s249 + $0xf8] sm:$0xff]
        %v339 = vld [vmem:[%s249 + $0x100] sm:$0xff]
        %v340 = vld [vmem:[%s249 + $0x108] sm:$0xff]
        %v341 = vld [vmem:[%s249 + $0x110] sm:$0xff]
        %v342 = vld [vmem:[%s249 + $0x118] sm:$0xff]
        %v343 = vld [vmem:[%s249 + $0x120] sm:$0xff]
        %v344 = vld [vmem:[%s249 + $0x128] sm:$0xff]
        %v345 = vld [vmem:[%s249 + $0x130] sm:$0xff]
        %v346 = vld [vmem:[%s249 + $0x138] sm:$0xff]
        %v347 = vld [vmem:[%s249 + $0x140] sm:$0xff]
        %v348 = vld [vmem:[%s249 + $0x148] sm:$0xff]
        %v349 = vld [vmem:[%s249 + $0x150] sm:$0xff]
        %v350 = vld [vmem:[%s249 + $0x158] sm:$0xff]
        %v351 = vld [vmem:[%s249 + $0x160] sm:$0xff]
        %v352 = vld [vmem:[%s249 + $0x168] sm:$0xff]
        %v353 = vld [vmem:[%s249 + $0x170] sm:$0xff]
        %v354 = vld [vmem:[%s249 + $0x178] sm:$0xff]
        %v355 = vld [vmem:[%s249 + $0x180] sm:$0xff]
        %v356 = vld [vmem:[%s249 + $0x188] sm:$0xff]
        %v357 = vld [vmem:[%s249 + $0x190] sm:$0xff]
        %v358 = vld [vmem:[%s249 + $0x198] sm:$0xff]
        %v359 = vld [vmem:[%s249 + $0x1a0] sm:$0xff]
        %v360 = vld [vmem:[%s249 + $0x1a8] sm:$0xff]
        %v361 = vld [vmem:[%s249 + $0x1b0] sm:$0xff]
        %v362 = vld [vmem:[%s249 + $0x1b8] sm:$0xff]
        %v363 = vld [vmem:[%s249 + $0x1c0] sm:$0xff]
        %v364 = vld [vmem:[%s249 + $0x1c8] sm:$0xff]
        %v365 = vld [vmem:[%s249 + $0x1d0] sm:$0xff]
        %v366 = vld [vmem:[%s249 + $0x1d8] sm:$0xff]
        %v367 = vld [vmem:[%s249 + $0x1e0] sm:$0xff]
        %v368 = vld [vmem:[%s249 + $0x1e8] sm:$0xff]
        %v369 = vld [vmem:[%s249 + $0x1f0] sm:$0xff]
        %v370 = vld [vmem:[%s249 + $0x1f8] sm:$0xff]
        %v371 = vld [vmem:[%s249 + $0x200] sm:$0xff]
        %v372 = vld [vmem:[%s249 + $0x208] sm:$0xff]
        %v373 = vld [vmem:[%s249 + $0x210] sm:$0xff]
        %v374 = vld [vmem:[%s249 + $0x218] sm:$0xff]
        %v375 = vld [vmem:[%s249 + $0x220] sm:$0xff]
        %v376 = vld [vmem:[%s249 + $0x228] sm:$0xff]
        %v377 = vld [vmem:[%s249 + $0x230] sm:$0xff]
        %v378 = vld [vmem:[%s249 + $0x238] sm:$0xff]
        %v379 = vld [vmem:[%s249 + $0x240] sm:$0xff]
        %v380 = vld [vmem:[%s249 + $0x248] sm:$0xff]
        %v381 = vld [vmem:[%s249 + $0x250] sm:$0xff]
        %v382 = vld [vmem:[%s249 + $0x258] sm:$0xff]
        %v383 = vld [vmem:[%s249 + $0x260] sm:$0xff]
        %v384 = vld [vmem:[%s249 + $0x268] sm:$0xff]
        %v385 = vld [vmem:[%s249 + $0x270] sm:$0xff]
        %v386 = vld [vmem:[%s249 + $0x278] sm:$0xff]
        %v387 = vld [vmem:[%s249 + $0x280] sm:$0xff]
        %v388 = vld [vmem:[%s249 + $0x288] sm:$0xff]
        %v389 = vld [vmem:[%s249 + $0x290] sm:$0xff]
        %v390 = vld [vmem:[%s249 + $0x298] sm:$0xff]
        %v391 = vld [vmem:[%s249 + $0x2a0] sm:$0xff]
        %v392 = vld [vmem:[%s249 + $0x2a8] sm:$0xff]
        %v393 = vld [vmem:[%s249 + $0x2b0] sm:$0xff]
        %v394 = vld [vmem:[%s249 + $0x2b8] sm:$0xff]
        %v395 = vld [vmem:[%s249 + $0x2c0] sm:$0xff]
        %v396 = vld [vmem:[%s249 + $0x2c8] sm:$0xff]
        %v397 = vld [vmem:[%s249 + $0x2d0] sm:$0xff]
        %v398 = vld [vmem:[%s249 + $0x2d8] sm:$0xff]
        %v399 = vld [vmem:[%s249 + $0x2e0] sm:$0xff]
        %v400 = vld [vmem:[%s249 + $0x2e8] sm:$0xff]
        %v401 = vld [vmem:[%s249 + $0x2f0] sm:$0xff]
        %v402 = vld [vmem:[%s249 + $0x2f8] sm:$0xff]
        %v403 = vld [vmem:[%s249 + $0x300] sm:$0xff]
        %v404 = vld [vmem:[%s249 + $0x308] sm:$0xff]
        %v405 = vld [vmem:[%s249 + $0x310] sm:$0xff]
        %v406 = vld [vmem:[%s249 + $0x318] sm:$0xff]
        %v407 = vld [vmem:[%s249 + $0x320] sm:$0xff]
        %v408 = vld [vmem:[%s249 + $0x328] sm:$0xff]
        %v409 = vld [vmem:[%s249 + $0x330] sm:$0xff]
        %v410 = vld [vmem:[%s249 + $0x338] sm:$0xff]
        %v411 = vld [vmem:[%s249 + $0x340] sm:$0xff]
        %v412 = vld [vmem:[%s249 + $0x348] sm:$0xff]
        %v413 = vld [vmem:[%s249 + $0x350] sm:$0xff]
        %v414 = vld [vmem:[%s249 + $0x358] sm:$0xff]
        %v415 = vld [vmem:[%s249 + $0x360] sm:$0xff]
        %v416 = vld [vmem:[%s249 + $0x368] sm:$0xff]
        %v417 = vld [vmem:[%s249 + $0x370] sm:$0xff]
        %v418 = vld [vmem:[%s249 + $0x378] sm:$0xff]
        %v419 = vld [vmem:[%s249 + $0x380] sm:$0xff]
        %v420 = vld [vmem:[%s249 + $0x388] sm:$0xff]
        %v421 = vld [vmem:[%s249 + $0x390] sm:$0xff]
        %v422 = vld [vmem:[%s249 + $0x398] sm:$0xff]
        %v423 = vld [vmem:[%s249 + $0x3a0] sm:$0xff]
        %v424 = vld [vmem:[%s249 + $0x3a8] sm:$0xff]
        %v425 = vld [vmem:[%s249 + $0x3b0] sm:$0xff]
        %v426 = vld [vmem:[%s249 + $0x3b8] sm:$0xff]
        %v427 = vld [vmem:[%s249 + $0x3c0] sm:$0xff]
        %v428 = vld [vmem:[%s249 + $0x3c8] sm:$0xff]
        %v429 = vld [vmem:[%s249 + $0x3d0] sm:$0xff]
        %v430 = vld [vmem:[%s249 + $0x3d8] sm:$0xff]
        %v431 = vld [vmem:[%s249 + $0x3e0] sm:$0xff]
        %v432 = vld [vmem:[%s249 + $0x3e8] sm:$0xff]
        %v433 = vld [vmem:[%s249 + $0x3f0] sm:$0xff]
        %v434 = vld [vmem:[%s249 + $0x3f8] sm:$0xff]
        %v436 = vunpack.c.l.b16 %v306
        %v437 = vunpack.c.h.b16 %v306
        %v438 = vpack.c.b16 %v436, %v436
        %v439 = vpack.c.b16 %v437, %v437
        %v570 = vunpack.c.l.b16 %v307
        %v571 = vunpack.c.h.b16 %v307
        %v572 = vunpack.c.l.b16 %v308
        %v573 = vunpack.c.h.b16 %v308
        %v574 = vunpack.c.l.b16 %v309
        %v575 = vunpack.c.h.b16 %v309
        %v576 = vunpack.c.l.b16 %v310
        %v577 = vunpack.c.h.b16 %v310
        %v578 = vunpack.c.l.b16 %v311
        %v579 = vunpack.c.h.b16 %v311
        %v580 = vunpack.c.l.b16 %v312
        %v581 = vunpack.c.h.b16 %v312
        %v582 = vunpack.c.l.b16 %v313
        %v583 = vunpack.c.h.b16 %v313
        %v584 = vunpack.c.l.b16 %v314
        %v585 = vunpack.c.h.b16 %v314
        %v586 = vunpack.c.l.b16 %v315
        %v587 = vunpack.c.h.b16 %v315
        %v588 = vunpack.c.l.b16 %v316
        %v589 = vunpack.c.h.b16 %v316
        %v590 = vunpack.c.l.b16 %v317
        %v591 = vunpack.c.h.b16 %v317
        %v592 = vunpack.c.l.b16 %v318
        %v593 = vunpack.c.h.b16 %v318
        %v594 = vunpack.c.l.b16 %v319
        %v595 = vunpack.c.h.b16 %v319
        %v596 = vunpack.c.l.b16 %v320
        %v597 = vunpack.c.h.b16 %v320
        %v598 = vunpack.c.l.b16 %v321
        %v599 = vunpack.c.h.b16 %v321
        %v600 = vunpack.c.l.b16 %v322
        %v601 = vunpack.c.h.b16 %v322
        %v602 = vunpack.c.l.b16 %v323
        %v603 = vunpack.c.h.b16 %v323
        %v604 = vunpack.c.l.b16 %v324
        %v605 = vunpack.c.h.b16 %v324
        %v606 = vunpack.c.l.b16 %v325
        %v607 = vunpack.c.h.b16 %v325
        %v608 = vunpack.c.l.b16 %v326
        %v609 = vunpack.c.h.b16 %v326
        %v610 = vunpack.c.l.b16 %v327
        %v611 = vunpack.c.h.b16 %v327
        %v612 = vunpack.c.l.b16 %v328
        %v613 = vunpack.c.h.b16 %v328
        %v614 = vunpack.c.l.b16 %v329
        %v615 = vunpack.c.h.b16 %v329
        %v616 = vunpack.c.l.b16 %v330
        %v617 = vunpack.c.h.b16 %v330
        %v618 = vunpack.c.l.b16 %v331
        %v619 = vunpack.c.h.b16 %v331
        %v620 = vunpack.c.l.b16 %v332
        %v621 = vunpack.c.h.b16 %v332
        %v622 = vunpack.c.l.b16 %v333
        %v623 = vunpack.c.h.b16 %v333
        %v624 = vunpack.c.l.b16 %v334
        %v625 = vunpack.c.h.b16 %v334
        %v626 = vunpack.c.l.b16 %v335
        %v627 = vunpack.c.h.b16 %v335
        %v628 = vunpack.c.l.b16 %v336
        %v629 = vunpack.c.h.b16 %v336
        %v630 = vunpack.c.l.b16 %v337
        %v631 = vunpack.c.h.b16 %v337
        %v632 = vunpack.c.l.b16 %v338
        %v633 = vunpack.c.h.b16 %v338
        %v634 = vunpack.c.l.b16 %v339
        %v635 = vunpack.c.h.b16 %v339
        %v636 = vunpack.c.l.b16 %v340
        %v637 = vunpack.c.h.b16 %v340
        %v638 = vunpack.c.l.b16 %v341
        %v639 = vunpack.c.h.b16 %v341
        %v640 = vunpack.c.l.b16 %v342
        %v641 = vunpack.c.h.b16 %v342
        %v642 = vunpack.c.l.b16 %v343
        %v643 = vunpack.c.h.b16 %v343
        %v644 = vunpack.c.l.b16 %v344
        %v645 = vunpack.c.h.b16 %v344
        %v646 = vunpack.c.l.b16 %v345
        %v647 = vunpack.c.h.b16 %v345
        %v648 = vunpack.c.l.b16 %v346
        %v649 = vunpack.c.h.b16 %v346
        %v650 = vunpack.c.l.b16 %v347
        %v651 = vunpack.c.h.b16 %v347
        %v652 = vunpack.c.l.b16 %v348
        %v653 = vunpack.c.h.b16 %v348
        %v654 = vunpack.c.l.b16 %v349
        %v655 = vunpack.c.h.b16 %v349
        %v656 = vunpack.c.l.b16 %v350
        %v657 = vunpack.c.h.b16 %v350
        %v658 = vunpack.c.l.b16 %v351
        %v659 = vunpack.c.h.b16 %v351
        %v660 = vunpack.c.l.b16 %v352
        %v661 = vunpack.c.h.b16 %v352
        %v662 = vunpack.c.l.b16 %v353
        %v663 = vunpack.c.h.b16 %v353
        %v664 = vunpack.c.l.b16 %v354
        %v665 = vunpack.c.h.b16 %v354
        %v666 = vunpack.c.l.b16 %v355
        %v667 = vunpack.c.h.b16 %v355
        %v668 = vunpack.c.l.b16 %v356
        %v669 = vunpack.c.h.b16 %v356
        %v670 = vunpack.c.l.b16 %v357
        %v671 = vunpack.c.h.b16 %v357
        %v672 = vunpack.c.l.b16 %v358
        %v673 = vunpack.c.h.b16 %v358
        %v674 = vunpack.c.l.b16 %v359
        %v675 = vunpack.c.h.b16 %v359
        %v676 = vunpack.c.l.b16 %v360
        %v677 = vunpack.c.h.b16 %v360
        %v678 = vunpack.c.l.b16 %v361
        %v679 = vunpack.c.h.b16 %v361
        %v680 = vunpack.c.l.b16 %v362
        %v681 = vunpack.c.h.b16 %v362
        %v682 = vunpack.c.l.b16 %v363
        %v683 = vunpack.c.h.b16 %v363
        %v684 = vunpack.c.l.b16 %v364
        %v685 = vunpack.c.h.b16 %v364
        %v686 = vunpack.c.l.b16 %v365
        %v687 = vunpack.c.h.b16 %v365
        %v688 = vunpack.c.l.b16 %v366
        %v689 = vunpack.c.h.b16 %v366
        %v690 = vunpack.c.l.b16 %v367
        %v691 = vunpack.c.h.b16 %v367
        %v692 = vunpack.c.l.b16 %v368
        %v693 = vunpack.c.h.b16 %v368
        %v694 = vunpack.c.l.b16 %v369
        %v695 = vunpack.c.h.b16 %v369
        %v696 = vunpack.c.l.b16 %v370
        %v697 = vunpack.c.h.b16 %v370
        %v698 = vunpack.c.l.b16 %v371
        %v699 = vunpack.c.h.b16 %v371
        %v700 = vunpack.c.l.b16 %v372
        %v701 = vunpack.c.h.b16 %v372
        %v702 = vunpack.c.l.b16 %v373
        %v703 = vunpack.c.h.b16 %v373
        %v704 = vunpack.c.l.b16 %v374
        %v705 = vunpack.c.h.b16 %v374
        %v706 = vunpack.c.l.b16 %v375
        %v707 = vunpack.c.h.b16 %v375
        %v708 = vunpack.c.l.b16 %v376
        %v709 = vunpack.c.h.b16 %v376
        %v710 = vunpack.c.l.b16 %v377
        %v711 = vunpack.c.h.b16 %v377
        %v712 = vunpack.c.l.b16 %v378
        %v713 = vunpack.c.h.b16 %v378
        %v714 = vunpack.c.l.b16 %v379
        %v715 = vunpack.c.h.b16 %v379
        %v716 = vunpack.c.l.b16 %v380
        %v717 = vunpack.c.h.b16 %v380
        %v718 = vunpack.c.l.b16 %v381
        %v719 = vunpack.c.h.b16 %v381
        %v720 = vunpack.c.l.b16 %v382
        %v721 = vunpack.c.h.b16 %v382
        %v722 = vunpack.c.l.b16 %v383
        %v723 = vunpack.c.h.b16 %v383
        %v724 = vunpack.c.l.b16 %v384
        %v725 = vunpack.c.h.b16 %v384
        %v726 = vunpack.c.l.b16 %v385
        %v727 = vunpack.c.h.b16 %v385
        %v728 = vunpack.c.l.b16 %v386
        %v729 = vunpack.c.h.b16 %v386
        %v730 = vunpack.c.l.b16 %v387
        %v731 = vunpack.c.h.b16 %v387
        %v732 = vunpack.c.l.b16 %v388
        %v733 = vunpack.c.h.b16 %v388
        %v734 = vunpack.c.l.b16 %v389
        %v735 = vunpack.c.h.b16 %v389
        %v736 = vunpack.c.l.b16 %v390
        %v737 = vunpack.c.h.b16 %v390
        %v738 = vunpack.c.l.b16 %v391
        %v739 = vunpack.c.h.b16 %v391
        %v740 = vunpack.c.l.b16 %v392
        %v741 = vunpack.c.h.b16 %v392
        %v742 = vunpack.c.l.b16 %v393
        %v743 = vunpack.c.h.b16 %v393
        %v744 = vunpack.c.l.b16 %v394
        %v745 = vunpack.c.h.b16 %v394
        %v746 = vunpack.c.l.b16 %v395
        %v747 = vunpack.c.h.b16 %v395
        %v748 = vunpack.c.l.b16 %v396
        %v749 = vunpack.c.h.b16 %v396
        %v750 = vunpack.c.l.b16 %v397
        %v751 = vunpack.c.h.b16 %v397
        %v752 = vunpack.c.l.b16 %v398
        %v753 = vunpack.c.h.b16 %v398
        %v754 = vunpack.c.l.b16 %v399
        %v755 = vunpack.c.h.b16 %v399
        %v756 = vunpack.c.l.b16 %v400
        %v757 = vunpack.c.h.b16 %v400
        %v758 = vunpack.c.l.b16 %v401
        %v759 = vunpack.c.h.b16 %v401
        %v760 = vunpack.c.l.b16 %v402
        %v761 = vunpack.c.h.b16 %v402
        %v762 = vunpack.c.l.b16 %v403
        %v763 = vunpack.c.h.b16 %v403
        %v764 = vunpack.c.l.b16 %v404
        %v765 = vunpack.c.h.b16 %v404
        %v766 = vunpack.c.l.b16 %v405
        %v767 = vunpack.c.h.b16 %v405
        %v768 = vunpack.c.l.b16 %v406
        %v769 = vunpack.c.h.b16 %v406
        %v770 = vunpack.c.l.b16 %v407
        %v771 = vunpack.c.h.b16 %v407
        %v772 = vunpack.c.l.b16 %v408
        %v773 = vunpack.c.h.b16 %v408
        %v774 = vunpack.c.l.b16 %v409
        %v775 = vunpack.c.h.b16 %v409
        %v776 = vunpack.c.l.b16 %v410
        %v777 = vunpack.c.h.b16 %v410
        %v778 = vunpack.c.l.b16 %v411
        %v779 = vunpack.c.h.b16 %v411
        %v780 = vunpack.c.l.b16 %v412
        %v781 = vunpack.c.h.b16 %v412
        %v782 = vunpack.c.l.b16 %v413
        %v783 = vunpack.c.h.b16 %v413
        %v784 = vunpack.c.l.b16 %v414
        %v785 = vunpack.c.h.b16 %v414
        %v786 = vunpack.c.l.b16 %v415
        %v787 = vunpack.c.h.b16 %v415
        %v788 = vunpack.c.l.b16 %v416
        %v789 = vunpack.c.h.b16 %v416
        %v790 = vunpack.c.l.b16 %v417
        %v791 = vunpack.c.h.b16 %v417
        %v792 = vunpack.c.l.b16 %v418
        %v793 = vunpack.c.h.b16 %v418
        %v794 = vunpack.c.l.b16 %v419
        %v795 = vunpack.c.h.b16 %v419
        %v796 = vunpack.c.l.b16 %v420
        %v797 = vunpack.c.h.b16 %v420
        %v798 = vunpack.c.l.b16 %v421
        %v799 = vunpack.c.h.b16 %v421
        %v800 = vunpack.c.l.b16 %v422
        %v801 = vunpack.c.h.b16 %v422
        %v802 = vunpack.c.l.b16 %v423
        %v803 = vunpack.c.h.b16 %v423
        %v804 = vunpack.c.l.b16 %v424
        %v805 = vunpack.c.h.b16 %v424
        %v806 = vunpack.c.l.b16 %v425
        %v807 = vunpack.c.h.b16 %v425
        %v808 = vunpack.c.l.b16 %v426
        %v809 = vunpack.c.h.b16 %v426
        %v810 = vunpack.c.l.b16 %v427
        %v811 = vunpack.c.h.b16 %v427
        %v812 = vunpack.c.l.b16 %v428
        %v813 = vunpack.c.h.b16 %v428
        %v814 = vunpack.c.l.b16 %v429
        %v815 = vunpack.c.h.b16 %v429
        %v816 = vunpack.c.l.b16 %v430
        %v817 = vunpack.c.h.b16 %v430
        %v818 = vunpack.c.l.b16 %v431
        %v819 = vunpack.c.h.b16 %v431
        %v820 = vunpack.c.l.b16 %v432
        %v821 = vunpack.c.h.b16 %v432
        %v822 = vunpack.c.l.b16 %v433
        %v823 = vunpack.c.h.b16 %v433
        %v824 = vunpack.c.l.b16 %v434
        %v825 = vunpack.c.h.b16 %v434
        %v826 = vpack.c.b16 %v578, %v570
        %v827 = vpack.c.b16 %v579, %v571
        %v828 = vpack.c.b16 %v580, %v572
        %v829 = vpack.c.b16 %v581, %v573
        %v830 = vpack.c.b16 %v582, %v574
        %v831 = vpack.c.b16 %v583, %v575
        %v832 = vpack.c.b16 %v584, %v576
        %v833 = vpack.c.b16 %v585, %v577
        %v834 = vpack.c.b16 %v594, %v586
        %v835 = vpack.c.b16 %v595, %v587
        %v836 = vpack.c.b16 %v596, %v588
        %v837 = vpack.c.b16 %v597, %v589
        %v838 = vpack.c.b16 %v598, %v590
        %v839 = vpack.c.b16 %v599, %v591
        %v840 = vpack.c.b16 %v600, %v592
        %v841 = vpack.c.b16 %v601, %v593
        %v842 = vpack.c.b16 %v610, %v602
        %v843 = vpack.c.b16 %v611, %v603
        %v844 = vpack.c.b16 %v612, %v604
        %v845 = vpack.c.b16 %v613, %v605
        %v846 = vpack.c.b16 %v614, %v606
        %v847 = vpack.c.b16 %v615, %v607
        %v848 = vpack.c.b16 %v616, %v608
        %v849 = vpack.c.b16 %v617, %v609
        %v850 = vpack.c.b16 %v626, %v618
        %v851 = vpack.c.b16 %v627, %v619
        %v852 = vpack.c.b16 %v628, %v620
        %v853 = vpack.c.b16 %v629, %v621
        %v854 = vpack.c.b16 %v630, %v622
        %v855 = vpack.c.b16 %v631, %v623
        %v856 = vpack.c.b16 %v632, %v624
        %v857 = vpack.c.b16 %v633, %v625
        %v858 = vpack.c.b16 %v642, %v634
        %v859 = vpack.c.b16 %v643, %v635
        %v860 = vpack.c.b16 %v644, %v636
        %v861 = vpack.c.b16 %v645, %v637
        %v862 = vpack.c.b16 %v646, %v638
        %v863 = vpack.c.b16 %v647, %v639
        %v864 = vpack.c.b16 %v648, %v640
        %v865 = vpack.c.b16 %v649, %v641
        %v866 = vpack.c.b16 %v658, %v650
        %v867 = vpack.c.b16 %v659, %v651
        %v868 = vpack.c.b16 %v660, %v652
        %v869 = vpack.c.b16 %v661, %v653
        %v870 = vpack.c.b16 %v662, %v654
        %v871 = vpack.c.b16 %v663, %v655
        %v872 = vpack.c.b16 %v664, %v656
        %v873 = vpack.c.b16 %v665, %v657
        %v874 = vpack.c.b16 %v674, %v666
        %v875 = vpack.c.b16 %v675, %v667
        %v876 = vpack.c.b16 %v676, %v668
        %v877 = vpack.c.b16 %v677, %v669
        %v878 = vpack.c.b16 %v678, %v670
        %v879 = vpack.c.b16 %v679, %v671
        %v880 = vpack.c.b16 %v680, %v672
        %v881 = vpack.c.b16 %v681, %v673
        %v882 = vpack.c.b16 %v690, %v682
        %v883 = vpack.c.b16 %v691, %v683
        %v884 = vpack.c.b16 %v692, %v684
        %v885 = vpack.c.b16 %v693, %v685
        %v886 = vpack.c.b16 %v694, %v686
        %v887 = vpack.c.b16 %v695, %v687
        %v888 = vpack.c.b16 %v696, %v688
        %v889 = vpack.c.b16 %v697, %v689
        %v890 = vpack.c.b16 %v706, %v698
        %v891 = vpack.c.b16 %v707, %v699
        %v892 = vpack.c.b16 %v708, %v700
        %v893 = vpack.c.b16 %v709, %v701
        %v894 = vpack.c.b16 %v710, %v702
        %v895 = vpack.c.b16 %v711, %v703
        %v896 = vpack.c.b16 %v712, %v704
        %v897 = vpack.c.b16 %v713, %v705
        %v898 = vpack.c.b16 %v722, %v714
        %v899 = vpack.c.b16 %v723, %v715
        %v900 = vpack.c.b16 %v724, %v716
        %v901 = vpack.c.b16 %v725, %v717
        %v902 = vpack.c.b16 %v726, %v718
        %v903 = vpack.c.b16 %v727, %v719
        %v904 = vpack.c.b16 %v728, %v720
        %v905 = vpack.c.b16 %v729, %v721
        %v906 = vpack.c.b16 %v738, %v730
        %v907 = vpack.c.b16 %v739, %v731
        %v908 = vpack.c.b16 %v740, %v732
        %v909 = vpack.c.b16 %v741, %v733
        %v910 = vpack.c.b16 %v742, %v734
        %v911 = vpack.c.b16 %v743, %v735
        %v912 = vpack.c.b16 %v744, %v736
        %v913 = vpack.c.b16 %v745, %v737
        %v914 = vpack.c.b16 %v754, %v746
        %v915 = vpack.c.b16 %v755, %v747
        %v916 = vpack.c.b16 %v756, %v748
        %v917 = vpack.c.b16 %v757, %v749
        %v918 = vpack.c.b16 %v758, %v750
        %v919 = vpack.c.b16 %v759, %v751
        %v920 = vpack.c.b16 %v760, %v752
        %v921 = vpack.c.b16 %v761, %v753
        %v922 = vpack.c.b16 %v770, %v762
        %v923 = vpack.c.b16 %v771, %v763
        %v924 = vpack.c.b16 %v772, %v764
        %v925 = vpack.c.b16 %v773, %v765
        %v926 = vpack.c.b16 %v774, %v766
        %v927 = vpack.c.b16 %v775, %v767
        %v928 = vpack.c.b16 %v776, %v768
        %v929 = vpack.c.b16 %v777, %v769
        %v930 = vpack.c.b16 %v786, %v778
        %v931 = vpack.c.b16 %v787, %v779
        %v932 = vpack.c.b16 %v788, %v780
        %v933 = vpack.c.b16 %v789, %v781
        %v934 = vpack.c.b16 %v790, %v782
        %v935 = vpack.c.b16 %v791, %v783
        %v936 = vpack.c.b16 %v792, %v784
        %v937 = vpack.c.b16 %v793, %v785
        %v938 = vpack.c.b16 %v802, %v794
        %v939 = vpack.c.b16 %v803, %v795
        %v940 = vpack.c.b16 %v804, %v796
        %v941 = vpack.c.b16 %v805, %v797
        %v942 = vpack.c.b16 %v806, %v798
        %v943 = vpack.c.b16 %v807, %v799
        %v944 = vpack.c.b16 %v808, %v800
        %v945 = vpack.c.b16 %v809, %v801
        %v946 = vpack.c.b16 %v818, %v810
        %v947 = vpack.c.b16 %v819, %v811
        %v948 = vpack.c.b16 %v820, %v812
        %v949 = vpack.c.b16 %v821, %v813
        %v950 = vpack.c.b16 %v822, %v814
        %v951 = vpack.c.b16 %v823, %v815
        %v952 = vpack.c.b16 %v824, %v816
        %v953 = vpack.c.b16 %v825, %v817
        %1082 = vmatprep.subr.bf16.mxu0 %v827
        %1083 = vmatpush1.bf16.msra.mxu0 %v826
        %1084 = vmatprep.subr.bf16.mxu0 %v835
        %1085 = vmatpush1.bf16.msra.mxu0 %v834
        %1086 = vmatprep.subr.bf16.mxu0 %v843
        %1087 = vmatpush1.bf16.msra.mxu0 %v842
        %1088 = vmatprep.subr.bf16.mxu0 %v851
        %1089 = vmatpush1.bf16.msra.mxu0 %v850
        %1090 = vmatprep.subr.bf16.mxu0 %v859
        %1091 = vmatpush1.bf16.msra.mxu0 %v858
        %1092 = vmatprep.subr.bf16.mxu0 %v867
        %1093 = vmatpush1.bf16.msra.mxu0 %v866
        %1094 = vmatprep.subr.bf16.mxu0 %v875
        %1095 = vmatpush1.bf16.msra.mxu0 %v874
        %1096 = vmatprep.subr.bf16.mxu0 %v883
        %1097 = vmatpush1.bf16.msra.mxu0 %v882
        %1098 = vmatprep.subr.bf16.mxu0 %v891
        %1099 = vmatpush1.bf16.msra.mxu0 %v890
        %1100 = vmatprep.subr.bf16.mxu0 %v899
        %1101 = vmatpush1.bf16.msra.mxu0 %v898
        %1102 = vmatprep.subr.bf16.mxu0 %v907
        %1103 = vmatpush1.bf16.msra.mxu0 %v906
        %1104 = vmatprep.subr.bf16.mxu0 %v915
        %1105 = vmatpush1.bf16.msra.mxu0 %v914
        %1106 = vmatprep.subr.bf16.mxu0 %v923
        %1107 = vmatpush1.bf16.msra.mxu0 %v922
        %1108 = vmatprep.subr.bf16.mxu0 %v931
        %1109 = vmatpush1.bf16.msra.mxu0 %v930
        %1110 = vmatprep.subr.bf16.mxu0 %v939
        %1111 = vmatpush1.bf16.msra.mxu0 %v938
        %1112 = vmatprep.subr.bf16.mxu0 %v947
        %1113 = vmatpush1.bf16.msra.mxu0 %v946
        %1114 = vmatprep.mubr.bf16.mxu0 %v439
        %1115 = vmatmul.mubr.bf16.gmra.mrb[0].mxu0 %v438
        %v1116 = vpop.f32.mrb[0].mxu0
        %v1117 = vadd.f32 0.0, %v1116
        %v1118 = vpop.f32.mrb[0].mxu0
        %v1119 = vadd.f32 0.0, %v1118
        %v1120 = vpop.f32.mrb[0].mxu0
        %v1121 = vpop.f32.mrb[0].mxu0
        %1122 = vdwg.mxu0
        %1123 = vmatprep.subr.bf16.mxu0 %v829
        %1124 = vmatpush1.bf16.msra.mxu0 %v828
        %1125 = vmatprep.subr.bf16.mxu0 %v837
        %1126 = vmatpush1.bf16.msra.mxu0 %v836
        %1127 = vmatprep.subr.bf16.mxu0 %v845
        %1128 = vmatpush1.bf16.msra.mxu0 %v844
        %1129 = vmatprep.subr.bf16.mxu0 %v853
        %1130 = vmatpush1.bf16.msra.mxu0 %v852
        %1131 = vmatprep.subr.bf16.mxu0 %v861
        %1132 = vmatpush1.bf16.msra.mxu0 %v860
        %1133 = vmatprep.subr.bf16.mxu0 %v869
        %1134 = vmatpush1.bf16.msra.mxu0 %v868
        %1135 = vmatprep.subr.bf16.mxu0 %v877
        %1136 = vmatpush1.bf16.msra.mxu0 %v876
        %1137 = vmatprep.subr.bf16.mxu0 %v885
        %1138 = vmatpush1.bf16.msra.mxu0 %v884
        %1139 = vmatprep.subr.bf16.mxu0 %v893
        %1140 = vmatpush1.bf16.msra.mxu0 %v892
        %1141 = vmatprep.subr.bf16.mxu0 %v901
        %1142 = vmatpush1.bf16.msra.mxu0 %v900
        %1143 = vmatprep.subr.bf16.mxu0 %v909
        %1144 = vmatpush1.bf16.msra.mxu0 %v908
        %1145 = vmatprep.subr.bf16.mxu0 %v917
        %1146 = vmatpush1.bf16.msra.mxu0 %v916
        %1147 = vmatprep.subr.bf16.mxu0 %v925
        %1148 = vmatpush1.bf16.msra.mxu0 %v924
        %1149 = vmatprep.subr.bf16.mxu0 %v933
        %1150 = vmatpush1.bf16.msra.mxu0 %v932
        %1151 = vmatprep.subr.bf16.mxu0 %v941
        %1152 = vmatpush1.bf16.msra.mxu0 %v940
        %1153 = vmatprep.subr.bf16.mxu0 %v949
        %1154 = vmatpush1.bf16.msra.mxu0 %v948
        %1155 = vmatprep.mubr.bf16.mxu0 %v439
        %1156 = vmatmul.mubr.bf16.gmra.mrb[0].mxu0 %v438
        %v1157 = vpop.f32.mrb[0].mxu0
        %v1158 = vadd.f32 0.0, %v1157
        %v1159 = vpop.f32.mrb[0].mxu0
        %v1160 = vadd.f32 0.0, %v1159
        %v1161 = vpop.f32.mrb[0].mxu0
        %v1162 = vpop.f32.mrb[0].mxu0
        %1163 = vdwg.mxu0
        %1164 = vmatprep.subr.bf16.mxu0 %v831
        %1165 = vmatpush1.bf16.msra.mxu0 %v830
        %1166 = vmatprep.subr.bf16.mxu0 %v839
        %1167 = vmatpush1.bf16.msra.mxu0 %v838
        %1168 = vmatprep.subr.bf16.mxu0 %v847
        %1169 = vmatpush1.bf16.msra.mxu0 %v846
        %1170 = vmatprep.subr.bf16.mxu0 %v855
        %1171 = vmatpush1.bf16.msra.mxu0 %v854
        %1172 = vmatprep.subr.bf16.mxu0 %v863
        %1173 = vmatpush1.bf16.msra.mxu0 %v862
        %1174 = vmatprep.subr.bf16.mxu0 %v871
        %1175 = vmatpush1.bf16.msra.mxu0 %v870
        %1176 = vmatprep.subr.bf16.mxu0 %v879
        %1177 = vmatpush1.bf16.msra.mxu0 %v878
        %1178 = vmatprep.subr.bf16.mxu0 %v887
        %1179 = vmatpush1.bf16.msra.mxu0 %v886
        %1180 = vmatprep.subr.bf16.mxu0 %v895
        %1181 = vmatpush1.bf16.msra.mxu0 %v894
        %1182 = vmatprep.subr.bf16.mxu0 %v903
        %1183 = vmatpush1.bf16.msra.mxu0 %v902
        %1184 = vmatprep.subr.bf16.mxu0 %v911
        %1185 = vmatpush1.bf16.msra.mxu0 %v910
        %1186 = vmatprep.subr.bf16.mxu0 %v919
        %1187 = vmatpush1.bf16.msra.mxu0 %v918
        %1188 = vmatprep.subr.bf16.mxu0 %v927
        %1189 = vmatpush1.bf16.msra.mxu0 %v926
        %1190 = vmatprep.subr.bf16.mxu0 %v935
        %1191 = vmatpush1.bf16.msra.mxu0 %v934
        %1192 = vmatprep.subr.bf16.mxu0 %v943
        %1193 = vmatpush1.bf16.msra.mxu0 %v942
        %1194 = vmatprep.subr.bf16.mxu0 %v951
        %1195 = vmatpush1.bf16.msra.mxu0 %v950
        %1196 = vmatprep.mubr.bf16.mxu0 %v439
        %1197 = vmatmul.mubr.bf16.gmra.mrb[0].mxu0 %v438
        %v1198 = vpop.f32.mrb[0].mxu0
        %v1199 = vadd.f32 0.0, %v1198
        %v1200 = vpop.f32.mrb[0].mxu0
        %v1201 = vadd.f32 0.0, %v1200
        %v1202 = vpop.f32.mrb[0].mxu0
        %v1203 = vpop.f32.mrb[0].mxu0
        %1204 = vdwg.mxu0
        %1205 = vmatprep.subr.bf16.mxu0 %v833
        %1206 = vmatpush1.bf16.msra.mxu0 %v832
        %1207 = vmatprep.subr.bf16.mxu0 %v841
        %1208 = vmatpush1.bf16.msra.mxu0 %v840
        %1209 = vmatprep.subr.bf16.mxu0 %v849
        %1210 = vmatpush1.bf16.msra.mxu0 %v848
        %1211 = vmatprep.subr.bf16.mxu0 %v857
        %1212 = vmatpush1.bf16.msra.mxu0 %v856
        %1213 = vmatprep.subr.bf16.mxu0 %v865
        %1214 = vmatpush1.bf16.msra.mxu0 %v864
        %1215 = vmatprep.subr.bf16.mxu0 %v873
        %1216 = vmatpush1.bf16.msra.mxu0 %v872
        %1217 = vmatprep.subr.bf16.mxu0 %v881
        %1218 = vmatpush1.bf16.msra.mxu0 %v880
        %1219 = vmatprep.subr.bf16.mxu0 %v889
        %1220 = vmatpush1.bf16.msra.mxu0 %v888
        %1221 = vmatprep.subr.bf16.mxu0 %v897
        %1222 = vmatpush1.bf16.msra.mxu0 %v896
        %1223 = vmatprep.subr.bf16.mxu0 %v905
        %1224 = vmatpush1.bf16.msra.mxu0 %v904
        %1225 = vmatprep.subr.bf16.mxu0 %v913
        %1226 = vmatpush1.bf16.msra.mxu0 %v912
        %1227 = vmatprep.subr.bf16.mxu0 %v921
        %1228 = vmatpush1.bf16.msra.mxu0 %v920
        %1229 = vmatprep.subr.bf16.mxu0 %v929
        %1230 = vmatpush1.bf16.msra.mxu0 %v928
        %1231 = vmatprep.subr.bf16.mxu0 %v937
        %1232 = vmatpush1.bf16.msra.mxu0 %v936
        %1233 = vmatprep.subr.bf16.mxu0 %v945
        %1234 = vmatpush1.bf16.msra.mxu0 %v944
        %1235 = vmatprep.subr.bf16.mxu0 %v953
        %1236 = vmatpush1.bf16.msra.mxu0 %v952
        %1237 = vmatprep.mubr.bf16.mxu0 %v439
        %1238 = vmatmul.mubr.bf16.gmra.mrb[0].mxu0 %v438
        %v1239 = vpop.f32.mrb[0].mxu0
        %v1240 = vadd.f32 0.0, %v1239
        %v1241 = vpop.f32.mrb[0].mxu0
        %v1242 = vadd.f32 0.0, %v1241
        %v1243 = vpop.f32.mrb[0].mxu0
        %v1244 = vpop.f32.mrb[0].mxu0
        %1245 = vdwg.mxu0
        %v1246 = vrot.slane %v1117, 4
        %v1247 = vadd.f32 %v1117, %v1246
        %v1248 = vrot.slane %v1247, 2
        %v1249 = vadd.f32 %v1247, %v1248
        %v1250 = vrot.slane %v1249, 1
        %v1251 = vadd.f32 %v1249, %v1250
        %v1252 = vrot.slane %v1119, 4
        %v1253 = vadd.f32 %v1119, %v1252
        %v1254 = vrot.slane %v1253, 2
        %v1255 = vadd.f32 %v1253, %v1254
        %v1256 = vrot.slane %v1255, 1
        %v1257 = vadd.f32 %v1255, %v1256
        %v1258 = vrot.slane %v1158, 4
        %v1259 = vadd.f32 %v1158, %v1258
        %v1260 = vrot.slane %v1259, 2
        %v1261 = vadd.f32 %v1259, %v1260
        %v1262 = vrot.slane %v1261, 1
        %v1263 = vadd.f32 %v1261, %v1262
        %v1264 = vrot.slane %v1160, 4
        %v1265 = vadd.f32 %v1160, %v1264
        %v1266 = vrot.slane %v1265, 2
        %v1267 = vadd.f32 %v1265, %v1266
        %v1268 = vrot.slane %v1267, 1
        %v1269 = vadd.f32 %v1267, %v1268
        %v1270 = vrot.slane %v1199, 4
        %v1271 = vadd.f32 %v1199, %v1270
        %v1272 = vrot.slane %v1271, 2
        %v1273 = vadd.f32 %v1271, %v1272
        %v1274 = vrot.slane %v1273, 1
        %v1275 = vadd.f32 %v1273, %v1274
        %v1276 = vrot.slane %v1201, 4
        %v1277 = vadd.f32 %v1201, %v1276
        %v1278 = vrot.slane %v1277, 2
        %v1279 = vadd.f32 %v1277, %v1278
        %v1280 = vrot.slane %v1279, 1
        %v1281 = vadd.f32 %v1279, %v1280
        %v1282 = vrot.slane %v1240, 4
        %v1283 = vadd.f32 %v1240, %v1282
        %v1284 = vrot.slane %v1283, 2
        %v1285 = vadd.f32 %v1283, %v1284
        %v1286 = vrot.slane %v1285, 1
        %v1287 = vadd.f32 %v1285, %v1286
        %v1288 = vrot.slane %v1242, 4
        %v1289 = vadd.f32 %v1242, %v1288
        %v1290 = vrot.slane %v1289, 2
        %v1291 = vadd.f32 %v1289, %v1290
        %v1292 = vrot.slane %v1291, 1
        %v1293 = vadd.f32 %v1291, %v1292
        %v1294 = vrcp.pop 8.0
        %v1295 = vmul.f32 %v1251, %v1294
        %v1296 = vmul.f32 %v1257, %v1294
        %v1297 = vmul.f32 %v1263, %v1294
        %v1298 = vmul.f32 %v1269, %v1294
        %v1299 = vmul.f32 %v1275, %v1294
        %v1300 = vmul.f32 %v1281, %v1294
        %v1301 = vmul.f32 %v1287, %v1294
        %v1302 = vmul.f32 %v1293, %v1294
        %v1303 = vsub.f32 %v1117, %v1295
        %v1304 = vsub.f32 %v1119, %v1296
        %v1305 = vsub.f32 %v1158, %v1297
        %v1306 = vsub.f32 %v1160, %v1298
        %v1307 = vsub.f32 %v1199, %v1299
        %v1308 = vsub.f32 %v1201, %v1300
        %v1309 = vsub.f32 %v1240, %v1301
        %v1310 = vsub.f32 %v1242, %v1302
        %v1311 = vmul.f32 %v1303, %v1303
        %v1312 = vmul.f32 %v1304, %v1304
        %v1313 = vmul.f32 %v1305, %v1305
        %v1314 = vmul.f32 %v1306, %v1306
        %v1315 = vmul.f32 %v1307, %v1307
        %v1316 = vmul.f32 %v1308, %v1308
        %v1317 = vmul.f32 %v1309, %v1309
        %v1318 = vmul.f32 %v1310, %v1310
        %v1319 = vrot.slane %v1311, 4
        %v1320 = vadd.f32 %v1311, %v1319
        %v1321 = vrot.slane %v1320, 2
        %v1322 = vadd.f32 %v1320, %v1321
        %v1323 = vrot.slane %v1322, 1
        %v1324 = vadd.f32 %v1322, %v1323
        %v1325 = vrot.slane %v1312, 4
        %v1326 = vadd.f32 %v1312, %v1325
        %v1327 = vrot.slane %v1326, 2
        %v1328 = vadd.f32 %v1326, %v1327
        %v1329 = vrot.slane %v1328, 1
        %v1330 = vadd.f32 %v1328, %v1329
        %v1331 = vrot.slane %v1313, 4
        %v1332 = vadd.f32 %v1313, %v1331
        %v1333 = vrot.slane %v1332, 2
        %v1334 = vadd.f32 %v1332, %v1333
        %v1335 = vrot.slane %v1334, 1
        %v1336 = vadd.f32 %v1334, %v1335
        %v1337 = vrot.slane %v1314, 4
        %v1338 = vadd.f32 %v1314, %v1337
        %v1339 = vrot.slane %v1338, 2
        %v1340 = vadd.f32 %v1338, %v1339
        %v1341 = vrot.slane %v1340, 1
        %v1342 = vadd.f32 %v1340, %v1341
        %v1343 = vrot.slane %v1315, 4
        %v1344 = vadd.f32 %v1315, %v1343
        %v1345 = vrot.slane %v1344, 2
        %v1346 = vadd.f32 %v1344, %v1345
        %v1347 = vrot.slane %v1346, 1
        %v1348 = vadd.f32 %v1346, %v1347
        %v1349 = vrot.slane %v1316, 4
        %v1350 = vadd.f32 %v1316, %v1349
        %v1351 = vrot.slane %v1350, 2
        %v1352 = vadd.f32 %v1350, %v1351
        %v1353 = vrot.slane %v1352, 1
        %v1354 = vadd.f32 %v1352, %v1353
        %v1355 = vrot.slane %v1317, 4
        %v1356 = vadd.f32 %v1317, %v1355
        %v1357 = vrot.slane %v1356, 2
        %v1358 = vadd.f32 %v1356, %v1357
        %v1359 = vrot.slane %v1358, 1
        %v1360 = vadd.f32 %v1358, %v1359
        %v1361 = vrot.slane %v1318, 4
        %v1362 = vadd.f32 %v1318, %v1361
        %v1363 = vrot.slane %v1362, 2
        %v1364 = vadd.f32 %v1362, %v1363
        %v1365 = vrot.slane %v1364, 1
        %v1366 = vadd.f32 %v1364, %v1365
        %v1367 = vmul.f32 %v1324, %v1294
        %v1368 = vmul.f32 %v1330, %v1294
        %v1369 = vmul.f32 %v1336, %v1294
        %v1370 = vmul.f32 %v1342, %v1294
        %v1371 = vmul.f32 %v1348, %v1294
        %v1372 = vmul.f32 %v1354, %v1294
        %v1373 = vmul.f32 %v1360, %v1294
        %v1374 = vmul.f32 %v1366, %v1294
        %v1375 = vadd.f32 %v1367, 1e-05
        %v1376 = vadd.f32 %v1368, 1e-05
        %v1377 = vadd.f32 %v1369, 1e-05
        %v1378 = vadd.f32 %v1370, 1e-05
        %v1379 = vadd.f32 %v1371, 1e-05
        %v1380 = vadd.f32 %v1372, 1e-05
        %v1381 = vadd.f32 %v1373, 1e-05
        %v1382 = vadd.f32 %v1374, 1e-05
        %v1383 = vrsqrt.pop %v1375
        %v1384 = vrsqrt.pop %v1376
        %v1385 = vrsqrt.pop %v1377
        %v1386 = vrsqrt.pop %v1378
        %v1387 = vrsqrt.pop %v1379
        %v1388 = vrsqrt.pop %v1380
        %v1389 = vrsqrt.pop %v1381
        %v1390 = vrsqrt.pop %v1382
        %v1391 = vld [vmem:[%s258] sm:$0xff]
        %v1393 = vlaneseq
        %v1394 = vshrl.u32 %v1393, 7
        %v1395 = vsub.s32 0, %v1394
        %v1396 = vrot.slane %v1391, %v1395
        %v1397 = vlaneseq
        %v1398 = vshrl.u32 %v1397, 7
        %v1399 = vsub.s32 1, %v1398
        %v1400 = vrot.slane %v1391, %v1399
        %v1401 = vlaneseq
        %v1402 = vshrl.u32 %v1401, 7
        %v1403 = vsub.s32 2, %v1402
        %v1404 = vrot.slane %v1391, %v1403
        %v1405 = vlaneseq
        %v1406 = vshrl.u32 %v1405, 7
        %v1407 = vsub.s32 3, %v1406
        %v1408 = vrot.slane %v1391, %v1407
        %v1409 = vlaneseq
        %v1410 = vshrl.u32 %v1409, 7
        %v1411 = vsub.s32 4, %v1410
        %v1412 = vrot.slane %v1391, %v1411
        %v1413 = vlaneseq
        %v1414 = vshrl.u32 %v1413, 7
        %v1415 = vsub.s32 5, %v1414
        %v1416 = vrot.slane %v1391, %v1415
        %v1417 = vlaneseq
        %v1418 = vshrl.u32 %v1417, 7
        %v1419 = vsub.s32 6, %v1418
        %v1420 = vrot.slane %v1391, %v1419
        %v1421 = vlaneseq
        %v1422 = vshrl.u32 %v1421, 7
        %v1423 = vsub.s32 7, %v1422
        %v1424 = vrot.slane %v1391, %v1423
        %v1433 = vmul.f32 %v1383, %v1396
        %v1434 = vmul.f32 %v1384, %v1400
        %v1435 = vmul.f32 %v1385, %v1404
        %v1436 = vmul.f32 %v1386, %v1408
        %v1437 = vmul.f32 %v1387, %v1412
        %v1438 = vmul.f32 %v1388, %v1416
        %v1439 = vmul.f32 %v1389, %v1420
        %v1440 = vmul.f32 %v1390, %v1424
        %v1441 = vlaneseq
        %v1442 = vshrl.u32 %v1441, 7
        %v1443 = vsub.s32 0, %v1442
        %v1444 = vrot.slane %v1433, %v1443
        %v1445 = vlaneseq
        %v1446 = vshrl.u32 %v1445, 7
        %v1447 = vsub.s32 0, %v1446
        %v1448 = vrot.slane %v1434, %v1447
        %v1449 = vlaneseq
        %v1450 = vshrl.u32 %v1449, 7
        %v1451 = vsub.s32 0, %v1450
        %v1452 = vrot.slane %v1435, %v1451
        %v1453 = vlaneseq
        %v1454 = vshrl.u32 %v1453, 7
        %v1455 = vsub.s32 0, %v1454
        %v1456 = vrot.slane %v1436, %v1455
        %v1457 = vlaneseq
        %v1458 = vshrl.u32 %v1457, 7
        %v1459 = vsub.s32 0, %v1458
        %v1460 = vrot.slane %v1437, %v1459
        %v1461 = vlaneseq
        %v1462 = vshrl.u32 %v1461, 7
        %v1463 = vsub.s32 0, %v1462
        %v1464 = vrot.slane %v1438, %v1463
        %v1465 = vlaneseq
        %v1466 = vshrl.u32 %v1465, 7
        %v1467 = vsub.s32 0, %v1466
        %v1468 = vrot.slane %v1439, %v1467
        %v1469 = vlaneseq
        %v1470 = vshrl.u32 %v1469, 7
        %v1471 = vsub.s32 0, %v1470
        %v1472 = vrot.slane %v1440, %v1471
        %v1473 = vmul.f32 %v1303, %v1444
        %v1474 = vmul.f32 %v1304, %v1448
        %v1475 = vmul.f32 %v1305, %v1452
        %v1476 = vmul.f32 %v1306, %v1456
        %v1477 = vmul.f32 %v1307, %v1460
        %v1478 = vmul.f32 %v1308, %v1464
        %v1479 = vmul.f32 %v1309, %v1468
        %v1480 = vmul.f32 %v1310, %v1472
        %v1481 = vld [vmem:[%s267] sm:$0xff]
        %v1483 = vlaneseq
        %v1484 = vshrl.u32 %v1483, 7
        %v1485 = vsub.s32 0, %v1484
        %v1486 = vrot.slane %v1481, %v1485
        %v1487 = vlaneseq
        %v1488 = vshrl.u32 %v1487, 7
        %v1489 = vsub.s32 1, %v1488
        %v1490 = vrot.slane %v1481, %v1489
        %v1491 = vlaneseq
        %v1492 = vshrl.u32 %v1491, 7
        %v1493 = vsub.s32 2, %v1492
        %v1494 = vrot.slane %v1481, %v1493
        %v1495 = vlaneseq
        %v1496 = vshrl.u32 %v1495, 7
        %v1497 = vsub.s32 3, %v1496
        %v1498 = vrot.slane %v1481, %v1497
        %v1499 = vlaneseq
        %v1500 = vshrl.u32 %v1499, 7
        %v1501 = vsub.s32 4, %v1500
        %v1502 = vrot.slane %v1481, %v1501
        %v1503 = vlaneseq
        %v1504 = vshrl.u32 %v1503, 7
        %v1505 = vsub.s32 5, %v1504
        %v1506 = vrot.slane %v1481, %v1505
        %v1507 = vlaneseq
        %v1508 = vshrl.u32 %v1507, 7
        %v1509 = vsub.s32 6, %v1508
        %v1510 = vrot.slane %v1481, %v1509
        %v1511 = vlaneseq
        %v1512 = vshrl.u32 %v1511, 7
        %v1513 = vsub.s32 7, %v1512
        %v1514 = vrot.slane %v1481, %v1513
        %v1523 = vadd.f32 %v1473, %v1486
        %v1524 = vadd.f32 %v1474, %v1490
        %v1525 = vadd.f32 %v1475, %v1494
        %v1526 = vadd.f32 %v1476, %v1498
        %v1527 = vadd.f32 %v1477, %v1502
        %v1528 = vadd.f32 %v1478, %v1506
        %v1529 = vadd.f32 %v1479, %v1510
        %v1530 = vadd.f32 %v1480, %v1514
        %v1531 = vmax.f32 %v1523, 0.0
        %v1532 = vmax.f32 %v1524, 0.0
        %v1533 = vmax.f32 %v1525, 0.0
        %v1534 = vmax.f32 %v1526, 0.0
        %v1535 = vmax.f32 %v1527, 0.0
        %v1536 = vmax.f32 %v1528, 0.0
        %v1537 = vmax.f32 %v1529, 0.0
        %v1538 = vmax.f32 %v1530, 0.0
        %1539 = vst [vmem:[%s301] sm:$0xff] %v1531
        %1540 = vst [vmem:[%s301 + $0x8] sm:$0xff] %v1532
        %1541 = vst [vmem:[%s301 + $0x10] sm:$0xff] %v1533
        %1542 = vst [vmem:[%s301 + $0x18] sm:$0xff] %v1534
        %1543 = vst [vmem:[%s301 + $0x20] sm:$0xff] %v1535
        %1544 = vst [vmem:[%s301 + $0x28] sm:$0xff] %v1536
        %1545 = vst [vmem:[%s301 + $0x30] sm:$0xff] %v1537
        %1546 = vst [vmem:[%s301 + $0x38] sm:$0xff] %v1538
        %s1547 = sand.u32 %s132, 1
        %s1548 = scalar_lea.sflag [#allocation4], %s1547
        %s1549 = sand.u32 %s132, 1
        %s1550 = smul.addr %s1549, 64
        %s1551 = scalar_lea.vmem [#allocation10], %s1550
        // Predicated region
        $region53: #{tpu_custom_call.1} parent=35 // pred_check
          %p1552 = pneg %p142
        $region54: #{tpu_custom_call.1} parent=35 // pred_check_branch
          %1554 = sbr.rel (%p1552) target = $region56
        $region55: #{tpu_custom_call.1} parent=35 // pred_region
          %s1555 = smul.u32 8, %s25
          %s1557 = ssub.s32 1024, 1024
          %1558 = vsyncadd %s1548, %s1557
          %s1559 = smul.addr %s1555, 128
          %s1560 = scalar_lea.hbm %s4, %s1559
          %s1562 = sshll.u32 %s1551, 4
          %s1563 = int_to_ptr.vmem [resolvable:$true] %s1562
          %1565 = dma.vmem_to_hbm [thread:$0]  %s1563, 1024, %s1560, %s1548
        $region56: #{tpu_custom_call.1} parent=35 // pred_fallthru
          _
      $region36: #{tpu_custom_call.1} parent=5 // pred_fallthru
        _
      %p1566 = scmp.le.s32.totalorder 2, %s20
      // Predicated region
      $region57: #{tpu_custom_call.1} parent=5 // pred_check
        %p1567 = pneg %p1566
      $region58: #{tpu_custom_call.1} parent=5 // pred_check_branch
        %1569 = sbr.rel (%p1567) target = $region60
      $region59: #{tpu_custom_call.1} parent=5 // pred_region
        %s1570 = ssub.s32 %s20, 2
        // Predicated region
        $region61: #{tpu_custom_call.1} parent=59 // pred_check
          %p1571 = pneg %p148
        $region62: #{tpu_custom_call.1} parent=59 // pred_check_branch
          %1573 = sbr.rel (%p1571) target = $region64
        $region63: #{tpu_custom_call.1} parent=59 // pred_region
          %s1574 = sand.u32 %s133, 1
          %s1575 = scalar_lea.sflag [#allocation4], %s1574
          %s1576 = sand.u32 %s133, 1
          %s1577 = smul.addr %s1576, 64
          %s1578 = scalar_lea.vmem [#allocation10], %s1577
          %1579 = dma.done %s1575, 1024
        $region64: #{tpu_custom_call.1} parent=59 // pred_fallthru
          _
      $region60: #{tpu_custom_call.1} parent=5 // pred_fallthru
        _
    $region6: #{tpu_custom_call.1} parent=1 // loop_footer
      %s24 = sadd.s32 1, %s20
    $region7: #{tpu_custom_call.1} parent=1 // loop_footer_branch
      %19 = sbr.rel target = $region3
    $region8: #{tpu_custom_call.1} parent=1 // loop_exit
      _
    %1580 = vsyncpa [#allocation3], 1
    %s1581 = scalar_lea.sflag [#allocation3], 1
    %1582 = vsyncpa %s1581, 1
    %1583 = vsyncpa [#allocation6], 1
    %s1584 = scalar_lea.sflag [#allocation6], 1
    %1585 = vsyncpa %s1584, 1
    %1586 = vsyncpa [#allocation9], 1
    %s1587 = scalar_lea.sflag [#allocation9], 1
    %1588 = vsyncpa %s1587, 1
    %1589 = vsyncpa [#allocation4], 1
    %s1590 = scalar_lea.sflag [#allocation4], 1
    %1591 = vsyncpa %s1590, 1

</llo_original>
